<compile_context>
chip_gen: v7x
topology: tpu7x:2x2x1
jax: 0.10.0
libtpu: 0.0.40
codegen_flags: <defaults>
</compile_context>

<pallas_src>
import functools

import jax
import jax.numpy as jnp
from jax import lax
from jax.experimental import pallas as pl
from jax.experimental.pallas import tpu as pltpu


def _lsce_tile_kernel(out_ref, tgt_ref, part_ref, *, n_total: int, tn: int):
    pid = pl.program_id(0)

    # TODO(synk): for bf16 inputs on v6e/v7x, keep max/compare/select in bf16 and
    # widen only for exp/sums (halves VALU/vreg traffic); kept f32 here so the
    # same kernel is also optimal on v5e (no bf16 VPU/EUP).
    x = out_ref[...].astype(jnp.float32)                                 # (TN, C)
    rows, c = x.shape

    # Per-row statistics (no (TN, C) log_preds intermediate).
    m = jnp.max(x, axis=-1, keepdims=True)                               # (TN, 1)
    s_exp = jnp.sum(jnp.exp(x - m), axis=-1, keepdims=True)              # (TN, 1)
    lse = m + jnp.log(s_exp)                                             # (TN, 1)
    s_x = jnp.sum(x, axis=-1, keepdims=True)                             # (TN, 1)

    # Gather x[i, target[i]] via one-hot compare; lane iota is (1, C) and
    # broadcasts against the (TN, 1) target column.
    col_ids = lax.broadcasted_iota(jnp.int32, (1, c), 1)                 # (1, C)
    tgt = tgt_ref[...]                                                   # (TN, 1)
    x_t = jnp.sum(jnp.where(col_ids == tgt, x, 0.0), axis=-1,
                  keepdims=True)                                         # (TN, 1)

    smooth_rows = c * lse - s_x          # -sum_j log_preds[i, j]
    nll_rows = lse - x_t                 # -log_preds[i, target[i]]

    # Mask rows beyond the true batch size (padded last tile reads garbage).
    row_ids = pid * tn + lax.broadcasted_iota(jnp.int32, (rows, 1), 0)
    valid = row_ids < n_total
    smooth_rows = jnp.where(valid, smooth_rows, 0.0)
    nll_rows = jnp.where(valid, nll_rows, 0.0)

    # Per-tile partials; combined (and epsilon/C/N scaled) outside the kernel.
    part_ref[0, 0] = jnp.sum(smooth_rows)
    part_ref[0, 1] = jnp.sum(nll_rows)


def _vmem_params():
    """(tile_budget_bytes, vmem_limit_bytes), generation-aware."""
    phys = 128 * 1024 * 1024
    try:
        info = pltpu.get_tpu_info()
        phys = getattr(info, "vmem_capacity_bytes", phys)
    except Exception:
        pass
    if phys <= 64 * 1024 * 1024:
        # v7x-class: 64 MiB physical / 32 MiB default scoped -> stay conservative.
        return 16 * 1024 * 1024, 32 * 1024 * 1024
    # 128 MiB parts (v5e / v6e): bigger tiles, raised scoped limit.
    return 32 * 1024 * 1024, 64 * 1024 * 1024


def _choose_row_tile(n: int, c: int, itemsize: int, tile_budget_bytes: int) -> int:
    # Per-row VMEM cost per pipeline stage:
    #   * logits block, double-buffered:                     2 * c * itemsize
    #   * (tn, 1) int32 target block pads to 128 lanes,
    #     double-buffered:                                   2 * 512
    #   * headroom for ~4 full-width f32 in-kernel temps
    #     (cast / exp / select / misc):                      4 * c * 4
    per_row = 2 * (c * itemsize + 512) + 4 * c * 4
    max_rows = max(8, tile_budget_bytes // per_row)
    if n <= max_rows:
        return n                          # single full-extent tile is allowed
    return max(8, (max_rows // 8) * 8)    # keep the (8, 128) tiling constraint


def label_smoothing_cross_entropy(output, target, epsilon: float = 0.1,
                                  reduction: str = 'mean',
                                  row_tile: int | None = None):
    """output: (N, C) float logits, target: (N,) int class indices -> scalar f32."""
    if reduction not in ('mean', 'sum'):
        # TODO(synk): reduction='none' returns a per-row vector in PyTorch; this
        # scalar-output kernel supports only 'mean'/'sum'.
        raise NotImplementedError("only 'mean' and 'sum' reductions supported")

    n, c = output.shape
    itemsize = jnp.dtype(output.dtype).itemsize
    tile_budget, vmem_limit = _vmem_params()

    if row_tile is not None:
        tn = int(row_tile)
        tn = n if tn >= n else max(8, (tn // 8) * 8)   # keep (8,128) constraint
    else:
        tn = _choose_row_tile(n, c, itemsize, tile_budget)
    num_tiles = (n + tn - 1) // tn

    # TODO(synk): for vocab-scale C where even an 8-row full-width block no longer
    # fits VMEM (especially v7x's 64 MiB), switch to a 2D grid over C-chunks with
    # online logsumexp accumulation.

    tgt = target.astype(jnp.int32).reshape(n, 1)
    kernel = functools.partial(_lsce_tile_kernel, n_total=n, tn=tn)

    parts = pl.pallas_call(
        kernel,
        out_shape=jax.ShapeDtypeStruct((num_tiles, 2), jnp.float32),
        grid=(num_tiles,),
        in_specs=[
            pl.BlockSpec((tn, c), lambda i: (i, 0)),          # logits row tile
            pl.BlockSpec((tn, 1), lambda i: (i, 0)),          # target row tile
        ],
        out_specs=pl.BlockSpec((1, 2), lambda i: (i, 0),
                               memory_space=pltpu.SMEM),      # per-tile partials
        compiler_params=pltpu.CompilerParams(
            dimension_semantics=("parallel",),                # independent tiles
            vmem_limit_bytes=vmem_limit,
        ),
    )(output, tgt)

    # Final combine in plain JAX (tiny (num_tiles, 2) array).
    smooth = jnp.sum(parts[:, 0])
    nll = jnp.sum(parts[:, 1])
    if reduction == 'mean':
        smooth = smooth / n
        nll = nll / n
    return epsilon * (smooth / c) + (1.0 - epsilon) * nll


def _reference(output, target, epsilon=0.1, reduction='mean'):
    log_preds = jax.nn.log_softmax(output.astype(jnp.float32), axis=-1)
    c = output.shape[-1]
    loss_vec = -log_preds.sum(axis=-1)
    nll_vec = -jnp.take_along_axis(log_preds, target[:, None].astype(jnp.int32),
                                   axis=-1)[:, 0]
    red = jnp.mean if reduction == 'mean' else jnp.sum
    return epsilon * (red(loss_vec) / c) + (1.0 - epsilon) * red(nll_vec)


if __name__ == "__main__":
    key = jax.random.PRNGKey(0)
    k1, k2, k3, k4 = jax.random.split(key, 4)

    # Case 1: small batch, single tile, mean reduction.
    N1, C1 = 8, 32
    logits1 = jax.random.normal(k1, (N1, C1), dtype=jnp.float32)
    target1 = jax.random.randint(k2, (N1,), 0, C1, dtype=jnp.int32)
    out1 = label_smoothing_cross_entropy(logits1, target1, epsilon=0.1,
                                         reduction='mean')
    out1 = jax.block_until_ready(out1)
    ref1 = _reference(logits1, target1, epsilon=0.1, reduction='mean')
    assert jnp.allclose(out1, ref1, atol=1e-4, rtol=1e-5), (out1, ref1)

    # Case 2: N not a multiple of the row tile -> exercises the multi-tile
    # parallel grid, per-tile partials and padded-row masking (sum reduction).
    N2, C2 = 13, 40
    logits2 = jax.random.normal(k3, (N2, C2), dtype=jnp.float32)
    target2 = jax.random.randint(k4, (N2,), 0, C2, dtype=jnp.int32)
    out2 = label_smoothing_cross_entropy(logits2, target2, epsilon=0.1,
                                         reduction='sum', row_tile=8)
    out2 = jax.block_until_ready(out2)
    ref2 = _reference(logits2, target2, epsilon=0.1, reduction='sum')
    assert jnp.allclose(out2, ref2, atol=1e-4, rtol=1e-5), (out2, ref2)

    print("KERNEL_OK")
</pallas_src>

<mosaic_0001>
module attributes {stable_mosaic.version = 11 : i64} {
  func.func @_lsce_tile_kernel(%arg0: i32, %arg1: memref<8x32xf32, #tpu.memory_space<vmem>>, %arg2: memref<8x1xi32, #tpu.memory_space<vmem>>, %arg3: memref<1x2xf32, #tpu.memory_space<smem>>) attributes {dimension_semantics = [#tpu.dimension_semantics<parallel>], iteration_bounds = array<i64: 1>, scalar_prefetch = 0 : i64, scratch_operands = 0 : i64, tpu.core_type = #tpu.core_type<tc>, window_params = [{transform_indices = @transform_0, window_bounds = array<i64: 8, 32>}, {transform_indices = @transform_1, window_bounds = array<i64: 8, 1>}, {transform_indices = @transform_2, window_bounds = array<i64: 1, 2>}]} {
    %c0 = arith.constant 0 : index
    %c0_0 = arith.constant 0 : index
    %0 = vector.load %arg1[%c0, %c0_0] : memref<8x32xf32, #tpu.memory_space<vmem>>, vector<8x32xf32>
    %cst = arith.constant dense<0xFF800000> : vector<8xf32>
    %1 = vector.multi_reduction <maximumf>, %0, %cst [1] : vector<8x32xf32> to vector<8xf32>
    %2 = vector.shape_cast %1 : vector<8xf32> to vector<8x1xf32>
    %3 = vector.broadcast %2 : vector<8x1xf32> to vector<8x32xf32>
    %4 = arith.subf %0, %3 : vector<8x32xf32>
    %5 = math.exp %4 : vector<8x32xf32>
    %cst_1 = arith.constant dense<0.000000e+00> : vector<8xf32>
    %6 = vector.multi_reduction <add>, %5, %cst_1 [1] : vector<8x32xf32> to vector<8xf32>
    %7 = vector.shape_cast %6 : vector<8xf32> to vector<8x1xf32>
    %8 = math.log %7 : vector<8x1xf32>
    %9 = arith.addf %2, %8 : vector<8x1xf32>
    %cst_2 = arith.constant dense<0.000000e+00> : vector<8xf32>
    %10 = vector.multi_reduction <add>, %0, %cst_2 [1] : vector<8x32xf32> to vector<8xf32>
    %11 = vector.shape_cast %10 : vector<8xf32> to vector<8x1xf32>
    %12 = tpu.iota {dimensions = array<i32: 1>} : vector<1x32xi32>
    %c0_3 = arith.constant 0 : index
    %c0_4 = arith.constant 0 : index
    %13 = vector.load %arg2[%c0_3, %c0_4] : memref<8x1xi32, #tpu.memory_space<vmem>>, vector<8x1xi32>
    %14 = vector.broadcast %12 : vector<1x32xi32> to vector<8x32xi32>
    %15 = vector.broadcast %13 : vector<8x1xi32> to vector<8x32xi32>
    %16 = arith.cmpi eq, %14, %15 : vector<8x32xi32>
    %cst_5 = arith.constant 0.000000e+00 : f32
    %17 = vector.broadcast %cst_5 : f32 to vector<8x32xf32>
    %18 = arith.select %16, %0, %17 : vector<8x32xi1>, vector<8x32xf32>
    %cst_6 = arith.constant dense<0.000000e+00> : vector<8xf32>
    %19 = vector.multi_reduction <add>, %18, %cst_6 [1] : vector<8x32xf32> to vector<8xf32>
    %20 = vector.shape_cast %19 : vector<8xf32> to vector<8x1xf32>
    %cst_7 = arith.constant 3.200000e+01 : f32
    %21 = vector.broadcast %cst_7 : f32 to vector<8x1xf32>
    %22 = arith.mulf %21, %9 : vector<8x1xf32>
    %23 = arith.subf %22, %11 : vector<8x1xf32>
    %24 = arith.subf %9, %20 : vector<8x1xf32>
    %c8_i32 = arith.constant 8 : i32
    %25 = arith.muli %arg0, %c8_i32 : i32
    %26 = tpu.iota {dimensions = array<i32: 0>} : vector<8x1xi32>
    %27 = vector.broadcast %25 : i32 to vector<8x1xi32>
    %28 = arith.addi %27, %26 : vector<8x1xi32>
    %c8_i32_8 = arith.constant 8 : i32
    %29 = vector.broadcast %c8_i32_8 : i32 to vector<8x1xi32>
    %30 = arith.cmpi slt, %28, %29 : vector<8x1xi32>
    %cst_9 = arith.constant 0.000000e+00 : f32
    %31 = vector.broadcast %cst_9 : f32 to vector<8x1xf32>
    %32 = arith.select %30, %23, %31 : vector<8x1xi1>, vector<8x1xf32>
    %cst_10 = arith.constant 0.000000e+00 : f32
    %33 = vector.broadcast %cst_10 : f32 to vector<8x1xf32>
    %34 = arith.select %30, %24, %33 : vector<8x1xi1>, vector<8x1xf32>
    %35 = vector.shape_cast %32 : vector<8x1xf32> to vector<1x8x1xf32>
    %cst_11 = arith.constant dense<0.000000e+00> : vector<1xf32>
    %36 = vector.multi_reduction <add>, %35, %cst_11 [1, 2] : vector<1x8x1xf32> to vector<1xf32>
    %37 = vector.shape_cast %36 : vector<1xf32> to vector<1x1x1xf32>
    %38 = vector.extract %37[0, 0, 0] : f32 from vector<1x1x1xf32>
    %c0_12 = arith.constant 0 : index
    %c0_13 = arith.constant 0 : index
    %39 = memref.load %arg3[%c0_12, %c0_13] : memref<1x2xf32, #tpu.memory_space<smem>>
    memref.store %38, %arg3[%c0_12, %c0_13] : memref<1x2xf32, #tpu.memory_space<smem>>
    %40 = vector.shape_cast %34 : vector<8x1xf32> to vector<1x8x1xf32>
    %cst_14 = arith.constant dense<0.000000e+00> : vector<1xf32>
    %41 = vector.multi_reduction <add>, %40, %cst_14 [1, 2] : vector<1x8x1xf32> to vector<1xf32>
    %42 = vector.shape_cast %41 : vector<1xf32> to vector<1x1x1xf32>
    %43 = vector.extract %42[0, 0, 0] : f32 from vector<1x1x1xf32>
    %c0_15 = arith.constant 0 : index
    %c1 = arith.constant 1 : index
    %44 = memref.load %arg3[%c0_15, %c1] : memref<1x2xf32, #tpu.memory_space<smem>>
    memref.store %43, %arg3[%c0_15, %c1] : memref<1x2xf32, #tpu.memory_space<smem>>
    return
  }
  func.func @transform_0(%arg0: i32) -> (i32, i32) {
    %c0_i32 = arith.constant 0 : i32
    %c0_i32_0 = arith.constant 0 : i32
    return %arg0, %c0_i32 : i32, i32
  }
  func.func @transform_1(%arg0: i32) -> (i32, i32) {
    %c0_i32 = arith.constant 0 : i32
    %c0_i32_0 = arith.constant 0 : i32
    return %arg0, %c0_i32 : i32, i32
  }
  func.func @transform_2(%arg0: i32) -> (i32, i32) {
    %c0_i32 = arith.constant 0 : i32
    %c0_i32_0 = arith.constant 0 : i32
    return %arg0, %c0_i32 : i32, i32
  }
}

</mosaic_0001>

<llo_original>
// kernel: tpu_custom_call.1
$region0: #{tpu_custom_call.1}
  #allocation0 [shape = 'u32[]', space=smem, size = 0x4, offset = 0x4, fixed_abs, tag = 'smem constant byte address 0x4 - core index']
  #allocation1 [shape = 'u32[144,128]{1,0:T(1,128)}', space=vmem, size = 0x12000, scoped, tag = 'internal scratch']
  %s0 = inlined_call_operand.hbm [shape: f32[8,32], index: 0, kind: input, shape index: {}]
  %s1 = inlined_call_operand.hbm [shape: s32[8,1], index: 1, kind: input, shape index: {}]
  %s2 = inlined_call_operand.hbm [shape: f32[1,2], index: 2, kind: output, shape index: {}]
  %s3 = sld [smem:[#allocation0]]
  $region26: #{tpu_custom_call.1} parent=0
    _
  %s5 = ssub.s32 1, %s3
  %s6 = scalar_select 0, %s5, %s3
  $region1: #{tpu_custom_call.1} parent=0
    #allocation2 [shape = 'u8[4096]{0}', space=vmem, size = 0x1000, scoped, tag = 'input window, operand 0, single buffered']
    #allocation3 [shape = 's32[1]{0}', space=sflag, size = 0x4, scoped, tag = 'scoped memory for tpu_custom_call.1']
    #allocation4 [shape = 's32[1]{0}', space=sflag, size = 0x4, scoped, tag = 'scoped memory for tpu_custom_call.1']
    #allocation5 [shape = 'u8[4096]{0}', space=vmem, size = 0x1000, scoped, tag = 'input window, operand 1, single buffered']
    #allocation6 [shape = 's32[1]{0}', space=sflag, size = 0x4, scoped, tag = 'scoped memory for tpu_custom_call.1']
    #allocation7 [shape = 'u8[512]{0}', space=smem, size = 0x200, scoped, tag = 'output window, operand 0, single buffered']
    %7 = vsyncpa [#allocation3], 0
    %8 = vsyncpa [#allocation6], 0
    %9 = vsyncpa [#allocation4], 0
    // Predicated region
    $region2: #{tpu_custom_call.1} parent=1 // pred_check
      _
    $region3: #{tpu_custom_call.1} parent=1 // pred_check_branch
      %11 = sbr.rel (0) target = $region5
    $region4: #{tpu_custom_call.1} parent=1 // pred_region
      %s13 = ssub.s32 128, 128
      %14 = vsyncadd [#allocation3], %s13
      %s16 = sshll.u32 [#allocation2], 4
      %s17 = int_to_ptr.vmem [resolvable:$true] %s16
      %19 = dma.hbm_to_vmem [thread:$0]  %s0, 128, %s17, [#allocation3]
    $region5: #{tpu_custom_call.1} parent=1 // pred_fallthru
      _
    // Predicated region
    $region6: #{tpu_custom_call.1} parent=1 // pred_check
      _
    $region7: #{tpu_custom_call.1} parent=1 // pred_check_branch
      %21 = sbr.rel (0) target = $region9
    $region8: #{tpu_custom_call.1} parent=1 // pred_region
      %s23 = ssub.s32 128, 128
      %24 = vsyncadd [#allocation6], %s23
      %s26 = sshll.u32 [#allocation5], 4
      %s27 = int_to_ptr.vmem [resolvable:$true] %s26
      %29 = dma.hbm_to_vmem [thread:$0]  %s1, 128, %s27, [#allocation6]
    $region9: #{tpu_custom_call.1} parent=1 // pred_fallthru
      _
    // Predicated region
    $region10: #{tpu_custom_call.1} parent=1 // pred_check
      _
    $region11: #{tpu_custom_call.1} parent=1 // pred_check_branch
      %31 = sbr.rel (0) target = $region13
    $region12: #{tpu_custom_call.1} parent=1 // pred_region
      %32 = dma.done [#allocation3], 128
    $region13: #{tpu_custom_call.1} parent=1 // pred_fallthru
      _
    // Predicated region
    $region14: #{tpu_custom_call.1} parent=1 // pred_check
      _
    $region15: #{tpu_custom_call.1} parent=1 // pred_check_branch
      %34 = sbr.rel (0) target = $region17
    $region16: #{tpu_custom_call.1} parent=1 // pred_region
      %35 = dma.done [#allocation6], 128
    $region17: #{tpu_custom_call.1} parent=1 // pred_fallthru
      _
    %v36 = vld [vmem:[#allocation2] sm:$0xff]
    %vm37 = vcmask 261120
    %v38 = vsel %vm37, %v36, -inf
    %39 = vmax.xlane.f32.xlu0 %v38
    %v40 = vpop.xlane.xlu0 %39
    %v41 = vsub.f32 %v36, %v40
    %v42 = vmul.f32 %v41, 1.442695
    %v43 = vpow.pop %v42
    %v44 = vsel %vm37, %v43, 0.0
    %45 = vadd.xlane.f32.xlu0 %v44
    %v46 = vpop.xlane.xlu0 %45
    %v47 = vlog2.pop %v46
    %v48 = vmul.f32 %v47, 0.6931472
    %v49 = vadd.f32 %v40, %v48
    %v50 = vsel %vm37, %v36, 0.0
    %51 = vadd.xlane.f32.xlu0 %v50
    %v52 = vpop.xlane.xlu0 %51
    %v53 = vlaneseq
    %v54 = vand.u32 %v53, 127
    %v55 = vld [vmem:[#allocation5] sm:$0xff]
    %56 = vset.pattern.permute.xlu0 0
    %57 = vperm.xlu0 %56, %v55
    %v58 = vpop.permute.xlu0 %57
    %vm59 = vcmp.eq.s32.totalorder %v54, %v58
    %v60 = vsel %vm59, %v36, 0.0
    %v61 = vsel %vm37, %v60, 0.0
    %62 = vadd.xlane.f32.xlu0 %v61
    %v63 = vpop.xlane.xlu0 %62
    %v64 = vmul.f32 %v49, 32.0
    %v65 = vsub.f32 %v64, %v52
    %v66 = vsub.f32 %v49, %v63
    %s67 = smul.u32 0, 8
    %v68 = vlaneseq
    %v69 = vshrl.u32 %v68, 7
    %v70 = vstv %s67
    %v71 = vadd.s32 %v70, %v69
    %vm72 = vcmp.lt.s32.totalorder %v71, 8
    %v73 = vsel %vm72, %v65, 0.0
    %v74 = vsel %vm72, %v66, 0.0
    %vm75 = vcmask 7168
    %v76 = vsel %vm75, %v73, 0.0
    %77 = vadd.xlane.f32.xlu0 %v76
    %v78 = vpop.xlane.xlu0 %77
    %v79 = vrot.slane %v78, 4
    %v80 = vadd.f32 %v78, %v79
    %v81 = vrot.slane %v80, 2
    %v82 = vadd.f32 %v80, %v81
    %v83 = vrot.slane %v82, 1
    %v84 = vadd.f32 %v82, %v83
    %s85 = vtos %v84
    %s86 = scalar_lea.smem [#allocation7], 0
    %87 = sst [smem:[%s86]] %s85
    %v88 = vsel %vm75, %v74, 0.0
    %89 = vadd.xlane.f32.xlu0 %v88
    %v90 = vpop.xlane.xlu0 %89
    %v91 = vrot.slane %v90, 4
    %v92 = vadd.f32 %v90, %v91
    %v93 = vrot.slane %v92, 2
    %v94 = vadd.f32 %v92, %v93
    %v95 = vrot.slane %v94, 1
    %v96 = vadd.f32 %v94, %v95
    %s97 = vtos %v96
    %s98 = scalar_lea.smem [#allocation7], 1
    %99 = sst [smem:[%s98]] %s97
    // Predicated region
    $region18: #{tpu_custom_call.1} parent=1 // pred_check
      _
    $region19: #{tpu_custom_call.1} parent=1 // pred_check_branch
      %101 = sbr.rel (0) target = $region21
    $region20: #{tpu_custom_call.1} parent=1 // pred_region
      %s103 = ssub.s32 16, 16
      %104 = vsyncadd [#allocation4], %s103
      %107 = dma.smem_to_hbm [#allocation7], 16, %s2, [#allocation4]
    $region21: #{tpu_custom_call.1} parent=1 // pred_fallthru
      _
    // Predicated region
    $region22: #{tpu_custom_call.1} parent=1 // pred_check
      _
    $region23: #{tpu_custom_call.1} parent=1 // pred_check_branch
      %109 = sbr.rel (0) target = $region25
    $region24: #{tpu_custom_call.1} parent=1 // pred_region
      %110 = dma.done [#allocation4], 16
    $region25: #{tpu_custom_call.1} parent=1 // pred_fallthru
      _
    %111 = sfence
    %112 = vsyncpa [#allocation3], 1
    %113 = vsyncpa [#allocation6], 1
    %114 = vsyncpa [#allocation4], 1

</llo_original>
